<compile_context>
chip_gen: v7x
topology: tpu7x:2x2x1
jax: 0.10.0
libtpu: 0.0.40
codegen_flags: <defaults>
</compile_context>

<pallas_src>
import jax
import jax.numpy as jnp
from jax import lax
from jax.experimental import pallas as pl
from jax.experimental.pallas import tpu as pltpu


LN_EPS = 1e-5  # torch.nn.LayerNorm default eps
_MAX_TILE = 4096  # packed rows per grid step (see VMEM accounting above)


def _cond_adapter_kernel(x_ref, w_ref, p_ref, s_ref, st_ref, o_ref):
    # x_ref : (tm, P*Din)      packed activations
    # w_ref : (P*Din, P*Dout)  block-diagonal projection weight
    # p_ref : (3, P*Dout)      [bias; gamma; beta], tiled P times, f32
    # s_ref : (P*Dout, P)      segment indicator (column p is 1 on segment p)
    # st_ref: (P, P*Dout)      its transpose (pre-materialized in the wrapper)
    # o_ref : (tm, P*Dout)
    d_out = s_ref.shape[0] // s_ref.shape[1]  # lanes per logical row (segment)
    inv_d = 1.0 / float(d_out)

    y = jnp.dot(x_ref[...], w_ref[...], preferred_element_type=jnp.float32)

    params = p_ref[...].astype(jnp.float32)
    bias = params[0:1, :]
    gamma = params[1:2, :]
    beta = params[2:3, :]
    y = y + bias

    s = s_ref[...]    # f32
    st = st_ref[...]  # f32

    # Segmented LayerNorm over each 64-lane group: reduce + broadcast on MXU.
    seg_sum = jnp.dot(y, s, preferred_element_type=jnp.float32)          # (tm, P)
    mean_b = jnp.dot(seg_sum, st, preferred_element_type=jnp.float32) * inv_d
    centered = y - mean_b
    seg_ssq = jnp.dot(centered * centered, s,
                      preferred_element_type=jnp.float32)                # (tm, P)
    var_b = jnp.dot(seg_ssq, st, preferred_element_type=jnp.float32) * inv_d

    out = centered * lax.rsqrt(var_b + LN_EPS) * gamma + beta
    o_ref[...] = out.astype(o_ref.dtype)


def _round_up(v, m):
    return (v + m - 1) // m * m


def _choose_pack(m, d_in, d_out):
    """Pack factor P: how many logical rows share one physical (lane) row."""
    if d_in >= 128 and d_out >= 128:
        return 1  # already lane-dense
    for p in (4, 2):
        if m % p == 0 and p * d_in <= 512 and p * d_out <= 512:
            return p
    return 1


def _choose_row_tile(mp, min_mult):
    """Packed-row tile.

    Tiny inputs run as a single block (block == full array, zero pipeline
    overhead).  Anything larger gets >= 2 grid steps so both v7x TensorCores
    receive work, with an even step count to avoid a 2:1 core imbalance, and
    tiles up to _MAX_TILE packed rows so per-step DMA dwarfs the ~0.35 us
    per-step overhead.  Padded double-buffered footprint at _MAX_TILE=4096,
    P=4, f32 is ~12.5 MiB — fits every generation's scoped VMEM default.
    """
    if mp <= 256:
        return mp
    tm = min(_MAX_TILE, _round_up(pl.cdiv(mp, 2), min_mult))
    steps = pl.cdiv(mp, tm)
    if steps % 2 == 1:  # rebalance to the next even step count
        steps += 1
        tm = max(min_mult, _round_up(pl.cdiv(mp, steps), min_mult))
    return tm


def _padded_tile_bytes(rows, cols, itemsize):
    sub = 8 if itemsize >= 4 else 16
    return _round_up(max(rows, 1), sub) * _round_up(max(cols, 1), 128) * itemsize


def condition_adapter_forward(x, w_t, bias, gamma, beta, *, tm=None):
    """x: (..., condition_dim) -> (..., cross_attention_dim).

    w_t is the torch Linear weight transposed to (condition_dim,
    cross_attention_dim).  Output dtype follows x.dtype (pass bf16 for
    half-sized HBM traffic on v5e/v6e); matmul accumulation and LayerNorm
    statistics stay in f32.
    """
    orig_shape = x.shape
    d_in = orig_shape[-1]
    d_out = w_t.shape[1]
    x2d = x.reshape(-1, d_in)
    m = x2d.shape[0]

    p = _choose_pack(m, d_in, d_out)
    mp = m // p
    din_p, dout_p = p * d_in, p * d_out

    # Free row-major reshape: P logical rows packed into one lane-dense row.
    x_pk = x2d.reshape(mp, din_p)

    itemsize = jnp.dtype(x.dtype).itemsize
    min_mult = 8 if itemsize >= 4 else 16

    if tm is None:
        tm = _choose_row_tile(mp, min_mult)
    else:
        tm = min(tm, mp)
        if tm < mp:  # guard sublane divisibility for user-supplied tiles
            tm = max(min_mult, (tm // min_mult) * min_mult)

    # Block-diagonal weight, tiled affine params, segment-indicator matrices.
    w_bd = jnp.kron(jnp.eye(p, dtype=w_t.dtype), w_t).astype(x.dtype)
    params = jnp.stack(
        [
            jnp.tile(bias.reshape(d_out).astype(jnp.float32), p),
            jnp.tile(gamma.reshape(d_out).astype(jnp.float32), p),
            jnp.tile(beta.reshape(d_out).astype(jnp.float32), p),
        ],
        axis=0,
    )  # (3, P*Dout)
    seg = jnp.kron(jnp.eye(p, dtype=jnp.float32),
                   jnp.ones((d_out, 1), jnp.float32))          # (P*Dout, P)
    seg_t = jnp.kron(jnp.eye(p, dtype=jnp.float32),
                     jnp.ones((1, d_out), jnp.float32))        # (P, P*Dout)

    grid = (pl.cdiv(mp, tm),)  # ragged last block handled by Pallas masking

    # Explicit VMEM budget from padded tile sizes (lane pad to 128, sublane to
    # 8/16, x2 for double buffering) so behavior never depends on the
    # generation-specific scoped default (v7x: 32 MiB default / 64 MiB phys).
    tile_bytes = 2 * (_padded_tile_bytes(tm, din_p, itemsize)
                      + _padded_tile_bytes(tm, dout_p, itemsize))
    const_bytes = 2 * (_padded_tile_bytes(din_p, dout_p, itemsize)
                       + _padded_tile_bytes(3, dout_p, 4)
                       + _padded_tile_bytes(dout_p, p, 4)
                       + _padded_tile_bytes(p, dout_p, 4))
    vmem_limit = int(min(max(tile_bytes + const_bytes + (4 << 20), 32 << 20),
                         64 << 20))

    cost = pl.CostEstimate(
        flops=int(2 * m * d_in * d_out + 8 * m * d_out),
        transcendentals=0,
        bytes_accessed=int(m * (d_in + d_out) * itemsize
                           + w_bd.size * itemsize + params.size * 4),
    )

    out = pl.pallas_call(
        _cond_adapter_kernel,
        out_shape=jax.ShapeDtypeStruct((mp, dout_p), x.dtype),
        grid_spec=pltpu.PrefetchScalarGridSpec(
            num_scalar_prefetch=0,
            grid=grid,
            in_specs=[
                pl.BlockSpec((tm, din_p), lambda i: (i, 0)),
                pl.BlockSpec((din_p, dout_p), lambda i: (0, 0)),
                pl.BlockSpec((3, dout_p), lambda i: (0, 0)),
                pl.BlockSpec((dout_p, p), lambda i: (0, 0)),
                pl.BlockSpec((p, dout_p), lambda i: (0, 0)),
            ],
            out_specs=pl.BlockSpec((tm, dout_p), lambda i: (i, 0)),
        ),
        compiler_params=pltpu.CompilerParams(
            dimension_semantics=("parallel",),
            vmem_limit_bytes=vmem_limit,
        ),
        cost_estimate=cost,
    )(x_pk, w_bd, params, seg, seg_t)

    # Free reshape back to the logical layout.
    return out.reshape(*orig_shape[:-1], d_out)


def reference_forward(x, w_t, bias, gamma, beta):
    y = jnp.einsum("...i,ij->...j", x.astype(jnp.float32),
                   w_t.astype(jnp.float32)) + bias
    mean = jnp.mean(y, axis=-1, keepdims=True)
    var = jnp.mean((y - mean) ** 2, axis=-1, keepdims=True)
    return (y - mean) / jnp.sqrt(var + LN_EPS) * gamma + beta


if __name__ == "__main__":
    # config = {"condition_dim": 32, "cross_attention_dim": 64}
    condition_dim = 32
    cross_attention_dim = 64
    batch, seq = 2, 8

    key = jax.random.PRNGKey(0)
    kx, kw, kb = jax.random.split(key, 3)

    # torch Linear weight is (out, in); the kernel consumes its transpose.
    w_t = jax.random.normal(kw, (condition_dim, cross_attention_dim),
                            dtype=jnp.float32) * 0.02
    bias = jax.random.normal(kb, (cross_attention_dim,), dtype=jnp.float32) * 0.01
    gamma = jnp.ones((cross_attention_dim,), dtype=jnp.float32)   # LN weight init
    beta = jnp.zeros((cross_attention_dim,), dtype=jnp.float32)   # LN bias init

    x = jax.random.normal(kx, (batch, seq, condition_dim), dtype=jnp.float32)

    out = jax.block_until_ready(condition_adapter_forward(x, w_t, bias, gamma, beta))
    ref = reference_forward(x, w_t, bias, gamma, beta)
    assert out.shape == (batch, seq, cross_attention_dim)
    assert jnp.allclose(out, ref, atol=1e-4, rtol=1e-4)

    # Larger input: P=4 lane packing, multi-step "parallel" grid, ragged last
    # block (3000/4 = 750 packed rows -> 2 steps of 376, last one partial).
    big_m = 3000
    xb = jax.random.normal(jax.random.PRNGKey(1), (big_m, condition_dim),
                           dtype=jnp.float32)
    out_b = jax.block_until_ready(
        condition_adapter_forward(xb, w_t, bias, gamma, beta))
    ref_b = reference_forward(xb, w_t, bias, gamma, beta)
    assert out_b.shape == (big_m, cross_attention_dim)
    assert jnp.allclose(out_b, ref_b, atol=1e-4, rtol=1e-4)

    # Odd row count -> P=1 fallback (no packing); exercises the generic path.
    xo = jax.random.normal(jax.random.PRNGKey(2), (37, condition_dim),
                           dtype=jnp.float32)
    out_o = jax.block_until_ready(
        condition_adapter_forward(xo, w_t, bias, gamma, beta))
    ref_o = reference_forward(xo, w_t, bias, gamma, beta)
    assert jnp.allclose(out_o, ref_o, atol=1e-4, rtol=1e-4)

    # bf16 I/O smoke test (HBM-bound v5e/v6e path); accumulation stays f32.
    xh = x.astype(jnp.bfloat16)
    out_h = jax.block_until_ready(
        condition_adapter_forward(xh, w_t, bias, gamma, beta))
    assert out_h.dtype == jnp.bfloat16
    assert jnp.allclose(out_h.astype(jnp.float32), ref, atol=5e-2, rtol=5e-2)

    print("KERNEL_OK")
</pallas_src>

<mosaic_0001>
module attributes {stable_mosaic.version = 11 : i64} {
  func.func @_cond_adapter_kernel(%arg0: i32, %arg1: memref<4x128xf32, #tpu.memory_space<vmem>>, %arg2: memref<128x256xf32, #tpu.memory_space<vmem>>, %arg3: memref<3x256xf32, #tpu.memory_space<vmem>>, %arg4: memref<256x4xf32, #tpu.memory_space<vmem>>, %arg5: memref<4x256xf32, #tpu.memory_space<vmem>>, %arg6: memref<4x256xf32, #tpu.memory_space<vmem>>) attributes {dimension_semantics = [#tpu.dimension_semantics<parallel>], iteration_bounds = array<i64: 1>, scalar_prefetch = 0 : i64, scratch_operands = 0 : i64, tpu.core_type = #tpu.core_type<tc>, window_params = [{transform_indices = @transform_0, window_bounds = array<i64: 4, 128>}, {pipeline_mode = #tpu.pipeline_mode<synchronous>, transform_indices = @transform_1, window_bounds = array<i64: 128, 256>}, {pipeline_mode = #tpu.pipeline_mode<synchronous>, transform_indices = @transform_2, window_bounds = array<i64: 3, 256>}, {pipeline_mode = #tpu.pipeline_mode<synchronous>, transform_indices = @transform_3, window_bounds = array<i64: 256, 4>}, {pipeline_mode = #tpu.pipeline_mode<synchronous>, transform_indices = @transform_4, window_bounds = array<i64: 4, 256>}, {transform_indices = @transform_5, window_bounds = array<i64: 4, 256>}]} {
    %c0 = arith.constant 0 : index
    %c0_0 = arith.constant 0 : index
    %0 = vector.load %arg1[%c0, %c0_0] : memref<4x128xf32, #tpu.memory_space<vmem>>, vector<4x128xf32>
    %c0_1 = arith.constant 0 : index
    %c0_2 = arith.constant 0 : index
    %1 = vector.load %arg2[%c0_1, %c0_2] : memref<128x256xf32, #tpu.memory_space<vmem>>, vector<128x256xf32>
    %cst = arith.constant dense<0.000000e+00> : vector<4x256xf32>
    %2 = tpu.matmul %0, %1, %cst {dimension_numbers = #tpu.dot_dimension_numbers<[1], [0], [0], [1], [0, 0, 1, 1], [], []>} : vector<4x128xf32>, vector<128x256xf32>, vector<4x256xf32> -> vector<4x256xf32>
    %c0_3 = arith.constant 0 : index
    %c0_4 = arith.constant 0 : index
    %3 = vector.load %arg3[%c0_3, %c0_4] : memref<3x256xf32, #tpu.memory_space<vmem>>, vector<3x256xf32>
    %4 = vector.extract_strided_slice %3 {offsets = [0, 0], sizes = [1, 256], strides = [1, 1]} : vector<3x256xf32> to vector<1x256xf32>
    %5 = vector.extract_strided_slice %3 {offsets = [1, 0], sizes = [1, 256], strides = [1, 1]} : vector<3x256xf32> to vector<1x256xf32>
    %6 = vector.extract_strided_slice %3 {offsets = [2, 0], sizes = [1, 256], strides = [1, 1]} : vector<3x256xf32> to vector<1x256xf32>
    %7 = vector.broadcast %4 : vector<1x256xf32> to vector<4x256xf32>
    %8 = arith.addf %2, %7 : vector<4x256xf32>
    %c0_5 = arith.constant 0 : index
    %c0_6 = arith.constant 0 : index
    %9 = vector.load %arg4[%c0_5, %c0_6] : memref<256x4xf32, #tpu.memory_space<vmem>>, vector<256x4xf32>
    %c0_7 = arith.constant 0 : index
    %c0_8 = arith.constant 0 : index
    %10 = vector.load %arg5[%c0_7, %c0_8] : memref<4x256xf32, #tpu.memory_space<vmem>>, vector<4x256xf32>
    %cst_9 = arith.constant dense<0.000000e+00> : vector<4x4xf32>
    %11 = tpu.matmul %8, %9, %cst_9 {dimension_numbers = #tpu.dot_dimension_numbers<[1], [0], [0], [1], [0, 0, 1, 1], [], []>} : vector<4x256xf32>, vector<256x4xf32>, vector<4x4xf32> -> vector<4x4xf32>
    %cst_10 = arith.constant dense<0.000000e+00> : vector<4x256xf32>
    %12 = tpu.matmul %11, %10, %cst_10 {dimension_numbers = #tpu.dot_dimension_numbers<[1], [0], [0], [1], [0, 0, 1, 1], [], []>} : vector<4x4xf32>, vector<4x256xf32>, vector<4x256xf32> -> vector<4x256xf32>
    %cst_11 = arith.constant 1.562500e-02 : f32
    %13 = vector.broadcast %cst_11 : f32 to vector<4x256xf32>
    %14 = arith.mulf %12, %13 : vector<4x256xf32>
    %15 = arith.subf %8, %14 : vector<4x256xf32>
    %16 = arith.mulf %15, %15 : vector<4x256xf32>
    %cst_12 = arith.constant dense<0.000000e+00> : vector<4x4xf32>
    %17 = tpu.matmul %16, %9, %cst_12 {dimension_numbers = #tpu.dot_dimension_numbers<[1], [0], [0], [1], [0, 0, 1, 1], [], []>} : vector<4x256xf32>, vector<256x4xf32>, vector<4x4xf32> -> vector<4x4xf32>
    %cst_13 = arith.constant dense<0.000000e+00> : vector<4x256xf32>
    %18 = tpu.matmul %17, %10, %cst_13 {dimension_numbers = #tpu.dot_dimension_numbers<[1], [0], [0], [1], [0, 0, 1, 1], [], []>} : vector<4x4xf32>, vector<4x256xf32>, vector<4x256xf32> -> vector<4x256xf32>
    %cst_14 = arith.constant 1.562500e-02 : f32
    %19 = vector.broadcast %cst_14 : f32 to vector<4x256xf32>
    %20 = arith.mulf %18, %19 : vector<4x256xf32>
    %cst_15 = arith.constant 9.99999974E-6 : f32
    %21 = vector.broadcast %cst_15 : f32 to vector<4x256xf32>
    %22 = arith.addf %20, %21 : vector<4x256xf32>
    %23 = math.rsqrt %22 : vector<4x256xf32>
    %24 = arith.mulf %15, %23 : vector<4x256xf32>
    %25 = vector.broadcast %5 : vector<1x256xf32> to vector<4x256xf32>
    %26 = arith.mulf %24, %25 : vector<4x256xf32>
    %27 = vector.broadcast %6 : vector<1x256xf32> to vector<4x256xf32>
    %28 = arith.addf %26, %27 : vector<4x256xf32>
    %c0_16 = arith.constant 0 : index
    %c0_17 = arith.constant 0 : index
    %29 = vector.load %arg6[%c0_16, %c0_17] : memref<4x256xf32, #tpu.memory_space<vmem>>, vector<4x256xf32>
    tpu.vector_store %arg6[%c0_16, %c0_17], %28 {strides = array<i32>} : memref<4x256xf32, #tpu.memory_space<vmem>>, vector<4x256xf32>,
    return
  }
  func.func @transform_0(%arg0: i32) -> (i32, i32) {
    %c0_i32 = arith.constant 0 : i32
    %c0_i32_0 = arith.constant 0 : i32
    return %arg0, %c0_i32 : i32, i32
  }
  func.func @transform_1(%arg0: i32) -> (i32, i32) {
    %c0_i32 = arith.constant 0 : i32
    %c0_i32_0 = arith.constant 0 : i32
    %c0_i32_1 = arith.constant 0 : i32
    return %c0_i32, %c0_i32_0 : i32, i32
  }
  func.func @transform_2(%arg0: i32) -> (i32, i32) {
    %c0_i32 = arith.constant 0 : i32
    %c0_i32_0 = arith.constant 0 : i32
    %c0_i32_1 = arith.constant 0 : i32
    return %c0_i32, %c0_i32_0 : i32, i32
  }
  func.func @transform_3(%arg0: i32) -> (i32, i32) {
    %c0_i32 = arith.constant 0 : i32
    %c0_i32_0 = arith.constant 0 : i32
    %c0_i32_1 = arith.constant 0 : i32
    return %c0_i32, %c0_i32_0 : i32, i32
  }
  func.func @transform_4(%arg0: i32) -> (i32, i32) {
    %c0_i32 = arith.constant 0 : i32
    %c0_i32_0 = arith.constant 0 : i32
    %c0_i32_1 = arith.constant 0 : i32
    return %c0_i32, %c0_i32_0 : i32, i32
  }
  func.func @transform_5(%arg0: i32) -> (i32, i32) {
    %c0_i32 = arith.constant 0 : i32
    %c0_i32_0 = arith.constant 0 : i32
    return %arg0, %c0_i32 : i32, i32
  }
}

</mosaic_0001>

<llo_original>
// kernel: tpu_custom_call.1
$region0: #{tpu_custom_call.1}
  #allocation0 [shape = 'u32[]', space=smem, size = 0x4, offset = 0x4, fixed_abs, tag = 'smem constant byte address 0x4 - core index']
  #allocation1 [shape = 'u32[144,128]{1,0:T(1,128)}', space=vmem, size = 0x12000, scoped, tag = 'internal scratch']
  %s0 = inlined_call_operand.hbm [shape: f32[4,128], index: 0, kind: input, shape index: {}]
  %s1 = inlined_call_operand.vmem [shape: f32[128,256], index: 1, kind: input, shape index: {}]
  %s2 = inlined_call_operand.vmem [shape: f32[3,256], index: 2, kind: input, shape index: {}]
  %s3 = inlined_call_operand.vmem [shape: f32[256,4], index: 3, kind: input, shape index: {}]
  %s4 = inlined_call_operand.vmem [shape: f32[4,256], index: 4, kind: input, shape index: {}]
  %s5 = inlined_call_operand.hbm [shape: f32[4,256], index: 5, kind: output, shape index: {}]
  %s6 = sld [smem:[#allocation0]]
  $region34: #{tpu_custom_call.1} parent=0
    _
  %s8 = ssub.s32 1, %s6
  %s9 = scalar_select 0, %s8, %s6
  $region1: #{tpu_custom_call.1} parent=0
    #allocation2 [shape = 'u8[2048]{0}', space=vmem, size = 0x800, scoped, tag = 'input window, operand 0, single buffered']
    #allocation3 [shape = 's32[1]{0}', space=sflag, size = 0x4, scoped, tag = 'scoped memory for tpu_custom_call.1']
    #allocation4 [shape = 's32[1]{0}', space=sflag, size = 0x4, scoped, tag = 'scoped memory for tpu_custom_call.1']
    #allocation5 [shape = 'u8[4096]{0}', space=vmem, size = 0x1000, scoped, tag = 'output window, operand 0, single buffered']
    %10 = vsyncpa [#allocation3], 0
    %11 = vsyncpa [#allocation4], 0
    // Predicated region
    $region2: #{tpu_custom_call.1} parent=1 // pred_check
      _
    $region3: #{tpu_custom_call.1} parent=1 // pred_check_branch
      %13 = sbr.rel (0) target = $region5
    $region4: #{tpu_custom_call.1} parent=1 // pred_region
      %s15 = ssub.s32 64, 64
      %16 = vsyncadd [#allocation3], %s15
      %s18 = sshll.u32 [#allocation2], 4
      %s19 = int_to_ptr.vmem [resolvable:$true] %s18
      %21 = dma.hbm_to_vmem [thread:$0]  %s0, 64, %s19, [#allocation3]
    $region5: #{tpu_custom_call.1} parent=1 // pred_fallthru
      _
    // Predicated region
    $region6: #{tpu_custom_call.1} parent=1 // pred_check
      _
    $region7: #{tpu_custom_call.1} parent=1 // pred_check_branch
      %23 = sbr.rel (0) target = $region9
    $region8: #{tpu_custom_call.1} parent=1 // pred_region
      _
    $region9: #{tpu_custom_call.1} parent=1 // pred_fallthru
      _
    // Predicated region
    $region10: #{tpu_custom_call.1} parent=1 // pred_check
      _
    $region11: #{tpu_custom_call.1} parent=1 // pred_check_branch
      %25 = sbr.rel (0) target = $region13
    $region12: #{tpu_custom_call.1} parent=1 // pred_region
      _
    $region13: #{tpu_custom_call.1} parent=1 // pred_fallthru
      _
    // Predicated region
    $region14: #{tpu_custom_call.1} parent=1 // pred_check
      _
    $region15: #{tpu_custom_call.1} parent=1 // pred_check_branch
      %27 = sbr.rel (0) target = $region17
    $region16: #{tpu_custom_call.1} parent=1 // pred_region
      _
    $region17: #{tpu_custom_call.1} parent=1 // pred_fallthru
      _
    // Predicated region
    $region18: #{tpu_custom_call.1} parent=1 // pred_check
      _
    $region19: #{tpu_custom_call.1} parent=1 // pred_check_branch
      %29 = sbr.rel (0) target = $region21
    $region20: #{tpu_custom_call.1} parent=1 // pred_region
      _
    $region21: #{tpu_custom_call.1} parent=1 // pred_fallthru
      _
    // Predicated region
    $region22: #{tpu_custom_call.1} parent=1 // pred_check
      _
    $region23: #{tpu_custom_call.1} parent=1 // pred_check_branch
      %31 = sbr.rel (0) target = $region25
    $region24: #{tpu_custom_call.1} parent=1 // pred_region
      %32 = dma.done [#allocation3], 64
    $region25: #{tpu_custom_call.1} parent=1 // pred_fallthru
      _
    %v33 = vld [vmem:[#allocation2] sm:$0xf]
    %v34 = vld [vmem:[%s1] sm:$0xff]
    %v35 = vld [vmem:[%s1 + $0x8] sm:$0xff]
    %v36 = vld [vmem:[%s1 + $0x10] sm:$0xff]
    %v37 = vld [vmem:[%s1 + $0x18] sm:$0xff]
    %v38 = vld [vmem:[%s1 + $0x20] sm:$0xff]
    %v39 = vld [vmem:[%s1 + $0x28] sm:$0xff]
    %v40 = vld [vmem:[%s1 + $0x30] sm:$0xff]
    %v41 = vld [vmem:[%s1 + $0x38] sm:$0xff]
    %v42 = vld [vmem:[%s1 + $0x40] sm:$0xff]
    %v43 = vld [vmem:[%s1 + $0x48] sm:$0xff]
    %v44 = vld [vmem:[%s1 + $0x50] sm:$0xff]
    %v45 = vld [vmem:[%s1 + $0x58] sm:$0xff]
    %v46 = vld [vmem:[%s1 + $0x60] sm:$0xff]
    %v47 = vld [vmem:[%s1 + $0x68] sm:$0xff]
    %v48 = vld [vmem:[%s1 + $0x70] sm:$0xff]
    %v49 = vld [vmem:[%s1 + $0x78] sm:$0xff]
    %v50 = vld [vmem:[%s1 + $0x80] sm:$0xff]
    %v51 = vld [vmem:[%s1 + $0x88] sm:$0xff]
    %v52 = vld [vmem:[%s1 + $0x90] sm:$0xff]
    %v53 = vld [vmem:[%s1 + $0x98] sm:$0xff]
    %v54 = vld [vmem:[%s1 + $0xa0] sm:$0xff]
    %v55 = vld [vmem:[%s1 + $0xa8] sm:$0xff]
    %v56 = vld [vmem:[%s1 + $0xb0] sm:$0xff]
    %v57 = vld [vmem:[%s1 + $0xb8] sm:$0xff]
    %v58 = vld [vmem:[%s1 + $0xc0] sm:$0xff]
    %v59 = vld [vmem:[%s1 + $0xc8] sm:$0xff]
    %v60 = vld [vmem:[%s1 + $0xd0] sm:$0xff]
    %v61 = vld [vmem:[%s1 + $0xd8] sm:$0xff]
    %v62 = vld [vmem:[%s1 + $0xe0] sm:$0xff]
    %v63 = vld [vmem:[%s1 + $0xe8] sm:$0xff]
    %v64 = vld [vmem:[%s1 + $0xf0] sm:$0xff]
    %v65 = vld [vmem:[%s1 + $0xf8] sm:$0xff]
    %v66 = vld [vmem:[%s2] sm:$0x77]
    %v68 = vlaneseq
    %v69 = vshrl.u32 %v68, 7
    %v70 = vsub.s32 0, %v69
    %v71 = vrot.slane %v66, %v70
    %v72 = vlaneseq
    %v73 = vshrl.u32 %v72, 7
    %v74 = vsub.s32 4, %v73
    %v75 = vrot.slane %v66, %v74
    %v78 = vlaneseq
    %v79 = vshrl.u32 %v78, 7
    %v80 = vsub.s32 0, %v79
    %v81 = vrot.slane %v71, %v80
    %v82 = vlaneseq
    %v83 = vshrl.u32 %v82, 7
    %v84 = vsub.s32 0, %v83
    %v85 = vrot.slane %v75, %v84
    %86 = vmatprep.subr.mxu0 %v35
    %87 = vmatpush1.msra.mxu0 %v34
    %88 = vmatprep.subr.mxu0 %v37
    %89 = vmatpush1.msra.mxu0 %v36
    %90 = vmatprep.subr.mxu0 %v39
    %91 = vmatpush1.msra.mxu0 %v38
    %92 = vmatprep.subr.mxu0 %v41
    %93 = vmatpush1.msra.mxu0 %v40
    %94 = vmatprep.subr.mxu0 %v43
    %95 = vmatpush1.msra.mxu0 %v42
    %96 = vmatprep.subr.mxu0 %v45
    %97 = vmatpush1.msra.mxu0 %v44
    %98 = vmatprep.subr.mxu0 %v47
    %99 = vmatpush1.msra.mxu0 %v46
    %100 = vmatprep.subr.mxu0 %v49
    %101 = vmatpush1.msra.mxu0 %v48
    %102 = vmatprep.subr.mxu0 %v51
    %103 = vmatpush1.msra.mxu0 %v50
    %104 = vmatprep.subr.mxu0 %v53
    %105 = vmatpush1.msra.mxu0 %v52
    %106 = vmatprep.subr.mxu0 %v55
    %107 = vmatpush1.msra.mxu0 %v54
    %108 = vmatprep.subr.mxu0 %v57
    %109 = vmatpush1.msra.mxu0 %v56
    %110 = vmatprep.subr.mxu0 %v59
    %111 = vmatpush1.msra.mxu0 %v58
    %112 = vmatprep.subr.mxu0 %v61
    %113 = vmatpush1.msra.mxu0 %v60
    %114 = vmatprep.subr.mxu0 %v63
    %115 = vmatpush1.msra.mxu0 %v62
    %116 = vmatprep.subr.mxu0 %v65
    %117 = vmatpush1.msra.mxu0 %v64
    %118 = vmatprep.subr.mxu0 0.0
    %119 = vmatpush1.msra.mxu0 0.0
    %120 = vmatprep.subr.mxu0 0.0
    %121 = vmatpush1.msra.mxu0 0.0
    %122 = vmatprep.subr.mxu0 0.0
    %123 = vmatpush1.msra.mxu0 0.0
    %124 = vmatprep.subr.mxu0 0.0
    %125 = vmatpush1.msra.mxu0 0.0
    %126 = vmatprep.subr.mxu0 0.0
    %127 = vmatpush1.msra.mxu0 0.0
    %128 = vmatprep.subr.mxu0 0.0
    %129 = vmatpush1.msra.mxu0 0.0
    %130 = vmatprep.subr.mxu0 0.0
    %131 = vmatpush1.msra.mxu0 0.0
    %132 = vmatprep.subr.mxu0 0.0
    %133 = vmatpush1.msra.mxu0 0.0
    %134 = vmatprep.subr.mxu0 0.0
    %135 = vmatpush1.msra.mxu0 0.0
    %136 = vmatprep.subr.mxu0 0.0
    %137 = vmatpush1.msra.mxu0 0.0
    %138 = vmatprep.subr.mxu0 0.0
    %139 = vmatpush1.msra.mxu0 0.0
    %140 = vmatprep.subr.mxu0 0.0
    %141 = vmatpush1.msra.mxu0 0.0
    %142 = vmatprep.subr.mxu0 0.0
    %143 = vmatpush1.msra.mxu0 0.0
    %144 = vmatprep.subr.mxu0 0.0
    %145 = vmatpush1.msra.mxu0 0.0
    %146 = vmatprep.subr.mxu0 0.0
    %147 = vmatpush1.msra.mxu0 0.0
    %148 = vmatprep.subr.mxu0 0.0
    %149 = vmatpush1.msra.mxu0 0.0
    %150 = vmatprep.mubr.f32.mxu0 0.0
    %151 = vmatmul.mubr.f32.gmra.mrb[0].mxu0 %v33
    %v152 = vpop.f32.mrb[0].mxu0
    %v153 = vadd.f32 %v81, %v152
    %v154 = vpop.f32.mrb[0].mxu0
    %v155 = vadd.f32 %v85, %v154
    %156 = vdwg.mxu0
    %v157 = vld [vmem:[%s3] sm:$0xff]
    %v158 = vld [vmem:[%s3 + $0x8] sm:$0xff]
    %v159 = vld [vmem:[%s3 + $0x10] sm:$0xff]
    %v160 = vld [vmem:[%s3 + $0x18] sm:$0xff]
    %v161 = vld [vmem:[%s3 + $0x20] sm:$0xff]
    %v162 = vld [vmem:[%s3 + $0x28] sm:$0xff]
    %v163 = vld [vmem:[%s3 + $0x30] sm:$0xff]
    %v164 = vld [vmem:[%s3 + $0x38] sm:$0xff]
    %v165 = vld [vmem:[%s3 + $0x40] sm:$0xff]
    %v166 = vld [vmem:[%s3 + $0x48] sm:$0xff]
    %v167 = vld [vmem:[%s3 + $0x50] sm:$0xff]
    %v168 = vld [vmem:[%s3 + $0x58] sm:$0xff]
    %v169 = vld [vmem:[%s3 + $0x60] sm:$0xff]
    %v170 = vld [vmem:[%s3 + $0x68] sm:$0xff]
    %v171 = vld [vmem:[%s3 + $0x70] sm:$0xff]
    %v172 = vld [vmem:[%s3 + $0x78] sm:$0xff]
    %v173 = vld [vmem:[%s3 + $0x80] sm:$0xff]
    %v174 = vld [vmem:[%s3 + $0x88] sm:$0xff]
    %v175 = vld [vmem:[%s3 + $0x90] sm:$0xff]
    %v176 = vld [vmem:[%s3 + $0x98] sm:$0xff]
    %v177 = vld [vmem:[%s3 + $0xa0] sm:$0xff]
    %v178 = vld [vmem:[%s3 + $0xa8] sm:$0xff]
    %v179 = vld [vmem:[%s3 + $0xb0] sm:$0xff]
    %v180 = vld [vmem:[%s3 + $0xb8] sm:$0xff]
    %v181 = vld [vmem:[%s3 + $0xc0] sm:$0xff]
    %v182 = vld [vmem:[%s3 + $0xc8] sm:$0xff]
    %v183 = vld [vmem:[%s3 + $0xd0] sm:$0xff]
    %v184 = vld [vmem:[%s3 + $0xd8] sm:$0xff]
    %v185 = vld [vmem:[%s3 + $0xe0] sm:$0xff]
    %v186 = vld [vmem:[%s3 + $0xe8] sm:$0xff]
    %v187 = vld [vmem:[%s3 + $0xf0] sm:$0xff]
    %v188 = vld [vmem:[%s3 + $0xf8] sm:$0xff]
    %v189 = vld [vmem:[%s4] sm:$0xff]
    %190 = vmatprep.subr.mxu0 0.0
    %191 = vmatpush1.msra.mxu0 %v157
    %192 = vmatprep.subr.mxu0 0.0
    %193 = vmatpush1.msra.mxu0 %v158
    %194 = vmatprep.subr.mxu0 0.0
    %195 = vmatpush1.msra.mxu0 %v159
    %196 = vmatprep.subr.mxu0 0.0
    %197 = vmatpush1.msra.mxu0 %v160
    %198 = vmatprep.subr.mxu0 0.0
    %199 = vmatpush1.msra.mxu0 %v161
    %200 = vmatprep.subr.mxu0 0.0
    %201 = vmatpush1.msra.mxu0 %v162
    %202 = vmatprep.subr.mxu0 0.0
    %203 = vmatpush1.msra.mxu0 %v163
    %204 = vmatprep.subr.mxu0 0.0
    %205 = vmatpush1.msra.mxu0 %v164
    %206 = vmatprep.subr.mxu0 0.0
    %207 = vmatpush1.msra.mxu0 %v165
    %208 = vmatprep.subr.mxu0 0.0
    %209 = vmatpush1.msra.mxu0 %v166
    %210 = vmatprep.subr.mxu0 0.0
    %211 = vmatpush1.msra.mxu0 %v167
    %212 = vmatprep.subr.mxu0 0.0
    %213 = vmatpush1.msra.mxu0 %v168
    %214 = vmatprep.subr.mxu0 0.0
    %215 = vmatpush1.msra.mxu0 %v169
    %216 = vmatprep.subr.mxu0 0.0
    %217 = vmatpush1.msra.mxu0 %v170
    %218 = vmatprep.subr.mxu0 0.0
    %219 = vmatpush1.msra.mxu0 %v171
    %220 = vmatprep.subr.mxu0 0.0
    %221 = vmatpush1.msra.mxu0 %v172
    %222 = vmatprep.subr.mxu0 0.0
    %223 = vmatpush1.msra.mxu0 %v173
    %224 = vmatprep.subr.mxu0 0.0
    %225 = vmatpush1.msra.mxu0 %v174
    %226 = vmatprep.subr.mxu0 0.0
    %227 = vmatpush1.msra.mxu0 %v175
    %228 = vmatprep.subr.mxu0 0.0
    %229 = vmatpush1.msra.mxu0 %v176
    %230 = vmatprep.subr.mxu0 0.0
    %231 = vmatpush1.msra.mxu0 %v177
    %232 = vmatprep.subr.mxu0 0.0
    %233 = vmatpush1.msra.mxu0 %v178
    %234 = vmatprep.subr.mxu0 0.0
    %235 = vmatpush1.msra.mxu0 %v179
    %236 = vmatprep.subr.mxu0 0.0
    %237 = vmatpush1.msra.mxu0 %v180
    %238 = vmatprep.subr.mxu0 0.0
    %239 = vmatpush1.msra.mxu0 %v181
    %240 = vmatprep.subr.mxu0 0.0
    %241 = vmatpush1.msra.mxu0 %v182
    %242 = vmatprep.subr.mxu0 0.0
    %243 = vmatpush1.msra.mxu0 %v183
    %244 = vmatprep.subr.mxu0 0.0
    %245 = vmatpush1.msra.mxu0 %v184
    %246 = vmatprep.subr.mxu0 0.0
    %247 = vmatpush1.msra.mxu0 %v185
    %248 = vmatprep.subr.mxu0 0.0
    %249 = vmatpush1.msra.mxu0 %v186
    %250 = vmatprep.subr.mxu0 0.0
    %251 = vmatpush1.msra.mxu0 %v187
    %252 = vmatprep.subr.mxu0 0.0
    %253 = vmatpush1.msra.mxu0 %v188
    %254 = vmatprep.mubr.f32.mxu0 %v155
    %255 = vmatmul.mubr.f32.gmra.mrb[0].mxu0 %v153
    %v256 = vpop.f32.mrb[0].mxu0
    %v257 = vadd.f32 0.0, %v256
    %v258 = vpop.f32.mrb[0].mxu0
    %259 = vdwg.mxu0
    %v261 = vcombine.high %v189, %v189
    %vm262 = vcmask 31744
    %v264 = vsel %vm262, %v257, 0
    %vm266 = vcmask 1043456
    %v267 = vsel %vm266, %v189, 0
    %v269 = vsel %vm266, %v261, 0
    %271 = vmatprep.subr.mxu0 %v269
    %272 = vmatpush1.msra.mxu0 %v267
    %273 = vmatprep.subr.mxu0 0.0
    %274 = vmatpush1.msra.mxu0 0.0
    %275 = vmatprep.subr.mxu0 0.0
    %276 = vmatpush1.msra.mxu0 0.0
    %277 = vmatprep.subr.mxu0 0.0
    %278 = vmatpush1.msra.mxu0 0.0
    %279 = vmatprep.subr.mxu0 0.0
    %280 = vmatpush1.msra.mxu0 0.0
    %281 = vmatprep.subr.mxu0 0.0
    %282 = vmatpush1.msra.mxu0 0.0
    %283 = vmatprep.subr.mxu0 0.0
    %284 = vmatpush1.msra.mxu0 0.0
    %285 = vmatprep.subr.mxu0 0.0
    %286 = vmatpush1.msra.mxu0 0.0
    %287 = vmatprep.subr.mxu0 0.0
    %288 = vmatpush1.msra.mxu0 0.0
    %289 = vmatprep.subr.mxu0 0.0
    %290 = vmatpush1.msra.mxu0 0.0
    %291 = vmatprep.subr.mxu0 0.0
    %292 = vmatpush1.msra.mxu0 0.0
    %293 = vmatprep.subr.mxu0 0.0
    %294 = vmatpush1.msra.mxu0 0.0
    %295 = vmatprep.subr.mxu0 0.0
    %296 = vmatpush1.msra.mxu0 0.0
    %297 = vmatprep.subr.mxu0 0.0
    %298 = vmatpush1.msra.mxu0 0.0
    %299 = vmatprep.subr.mxu0 0.0
    %300 = vmatpush1.msra.mxu0 0.0
    %301 = vmatprep.subr.mxu0 0.0
    %302 = vmatpush1.msra.mxu0 0.0
    %303 = vmatprep.subr.mxu0 0.0
    %304 = vmatpush1.msra.mxu0 0.0
    %305 = vmatprep.subr.mxu0 0.0
    %306 = vmatpush1.msra.mxu0 0.0
    %307 = vmatprep.subr.mxu0 0.0
    %308 = vmatpush1.msra.mxu0 0.0
    %309 = vmatprep.subr.mxu0 0.0
    %310 = vmatpush1.msra.mxu0 0.0
    %311 = vmatprep.subr.mxu0 0.0
    %312 = vmatpush1.msra.mxu0 0.0
    %313 = vmatprep.subr.mxu0 0.0
    %314 = vmatpush1.msra.mxu0 0.0
    %315 = vmatprep.subr.mxu0 0.0
    %316 = vmatpush1.msra.mxu0 0.0
    %317 = vmatprep.subr.mxu0 0.0
    %318 = vmatpush1.msra.mxu0 0.0
    %319 = vmatprep.subr.mxu0 0.0
    %320 = vmatpush1.msra.mxu0 0.0
    %321 = vmatprep.subr.mxu0 0.0
    %322 = vmatpush1.msra.mxu0 0.0
    %323 = vmatprep.subr.mxu0 0.0
    %324 = vmatpush1.msra.mxu0 0.0
    %325 = vmatprep.subr.mxu0 0.0
    %326 = vmatpush1.msra.mxu0 0.0
    %327 = vmatprep.subr.mxu0 0.0
    %328 = vmatpush1.msra.mxu0 0.0
    %329 = vmatprep.subr.mxu0 0.0
    %330 = vmatpush1.msra.mxu0 0.0
    %331 = vmatprep.subr.mxu0 0.0
    %332 = vmatpush1.msra.mxu0 0.0
    %333 = vmatprep.subr.mxu0 0.0
    %334 = vmatpush1.msra.mxu0 0.0
    %335 = vmatprep.mubr.f32.mxu0 0.0
    %336 = vmatmul.mubr.f32.gmra.mrb[0].mxu0 %v264
    %v337 = vpop.f32.mrb[0].mxu0
    %v338 = vadd.f32 0.0, %v337
    %v339 = vpop.f32.mrb[0].mxu0
    %v340 = vadd.f32 0.0, %v339
    %341 = vdwg.mxu0
    %v342 = vmul.f32 %v338, 0.015625
    %v343 = vmul.f32 %v340, 0.015625
    %v344 = vsub.f32 %v153, %v342
    %v345 = vsub.f32 %v155, %v343
    %v346 = vmul.f32 %v344, %v344
    %v347 = vmul.f32 %v345, %v345
    %348 = vmatprep.subr.mxu0 0.0
    %349 = vmatpush1.msra.mxu0 %v157
    %350 = vmatprep.subr.mxu0 0.0
    %351 = vmatpush1.msra.mxu0 %v158
    %352 = vmatprep.subr.mxu0 0.0
    %353 = vmatpush1.msra.mxu0 %v159
    %354 = vmatprep.subr.mxu0 0.0
    %355 = vmatpush1.msra.mxu0 %v160
    %356 = vmatprep.subr.mxu0 0.0
    %357 = vmatpush1.msra.mxu0 %v161
    %358 = vmatprep.subr.mxu0 0.0
    %359 = vmatpush1.msra.mxu0 %v162
    %360 = vmatprep.subr.mxu0 0.0
    %361 = vmatpush1.msra.mxu0 %v163
    %362 = vmatprep.subr.mxu0 0.0
    %363 = vmatpush1.msra.mxu0 %v164
    %364 = vmatprep.subr.mxu0 0.0
    %365 = vmatpush1.msra.mxu0 %v165
    %366 = vmatprep.subr.mxu0 0.0
    %367 = vmatpush1.msra.mxu0 %v166
    %368 = vmatprep.subr.mxu0 0.0
    %369 = vmatpush1.msra.mxu0 %v167
    %370 = vmatprep.subr.mxu0 0.0
    %371 = vmatpush1.msra.mxu0 %v168
    %372 = vmatprep.subr.mxu0 0.0
    %373 = vmatpush1.msra.mxu0 %v169
    %374 = vmatprep.subr.mxu0 0.0
    %375 = vmatpush1.msra.mxu0 %v170
    %376 = vmatprep.subr.mxu0 0.0
    %377 = vmatpush1.msra.mxu0 %v171
    %378 = vmatprep.subr.mxu0 0.0
    %379 = vmatpush1.msra.mxu0 %v172
    %380 = vmatprep.subr.mxu0 0.0
    %381 = vmatpush1.msra.mxu0 %v173
    %382 = vmatprep.subr.mxu0 0.0
    %383 = vmatpush1.msra.mxu0 %v174
    %384 = vmatprep.subr.mxu0 0.0
    %385 = vmatpush1.msra.mxu0 %v175
    %386 = vmatprep.subr.mxu0 0.0
    %387 = vmatpush1.msra.mxu0 %v176
    %388 = vmatprep.subr.mxu0 0.0
    %389 = vmatpush1.msra.mxu0 %v177
    %390 = vmatprep.subr.mxu0 0.0
    %391 = vmatpush1.msra.mxu0 %v178
    %392 = vmatprep.subr.mxu0 0.0
    %393 = vmatpush1.msra.mxu0 %v179
    %394 = vmatprep.subr.mxu0 0.0
    %395 = vmatpush1.msra.mxu0 %v180
    %396 = vmatprep.subr.mxu0 0.0
    %397 = vmatpush1.msra.mxu0 %v181
    %398 = vmatprep.subr.mxu0 0.0
    %399 = vmatpush1.msra.mxu0 %v182
    %400 = vmatprep.subr.mxu0 0.0
    %401 = vmatpush1.msra.mxu0 %v183
    %402 = vmatprep.subr.mxu0 0.0
    %403 = vmatpush1.msra.mxu0 %v184
    %404 = vmatprep.subr.mxu0 0.0
    %405 = vmatpush1.msra.mxu0 %v185
    %406 = vmatprep.subr.mxu0 0.0
    %407 = vmatpush1.msra.mxu0 %v186
    %408 = vmatprep.subr.mxu0 0.0
    %409 = vmatpush1.msra.mxu0 %v187
    %410 = vmatprep.subr.mxu0 0.0
    %411 = vmatpush1.msra.mxu0 %v188
    %412 = vmatprep.mubr.f32.mxu0 %v347
    %413 = vmatmul.mubr.f32.gmra.mrb[0].mxu0 %v346
    %v414 = vpop.f32.mrb[0].mxu0
    %v415 = vadd.f32 0.0, %v414
    %v416 = vpop.f32.mrb[0].mxu0
    %417 = vdwg.mxu0
    %v419 = vsel %vm262, %v415, 0
    %421 = vmatprep.subr.mxu0 %v269
    %422 = vmatpush1.msra.mxu0 %v267
    %423 = vmatprep.subr.mxu0 0.0
    %424 = vmatpush1.msra.mxu0 0.0
    %425 = vmatprep.subr.mxu0 0.0
    %426 = vmatpush1.msra.mxu0 0.0
    %427 = vmatprep.subr.mxu0 0.0
    %428 = vmatpush1.msra.mxu0 0.0
    %429 = vmatprep.subr.mxu0 0.0
    %430 = vmatpush1.msra.mxu0 0.0
    %431 = vmatprep.subr.mxu0 0.0
    %432 = vmatpush1.msra.mxu0 0.0
    %433 = vmatprep.subr.mxu0 0.0
    %434 = vmatpush1.msra.mxu0 0.0
    %435 = vmatprep.subr.mxu0 0.0
    %436 = vmatpush1.msra.mxu0 0.0
    %437 = vmatprep.subr.mxu0 0.0
    %438 = vmatpush1.msra.mxu0 0.0
    %439 = vmatprep.subr.mxu0 0.0
    %440 = vmatpush1.msra.mxu0 0.0
    %441 = vmatprep.subr.mxu0 0.0
    %442 = vmatpush1.msra.mxu0 0.0
    %443 = vmatprep.subr.mxu0 0.0
    %444 = vmatpush1.msra.mxu0 0.0
    %445 = vmatprep.subr.mxu0 0.0
    %446 = vmatpush1.msra.mxu0 0.0
    %447 = vmatprep.subr.mxu0 0.0
    %448 = vmatpush1.msra.mxu0 0.0
    %449 = vmatprep.subr.mxu0 0.0
    %450 = vmatpush1.msra.mxu0 0.0
    %451 = vmatprep.subr.mxu0 0.0
    %452 = vmatpush1.msra.mxu0 0.0
    %453 = vmatprep.subr.mxu0 0.0
    %454 = vmatpush1.msra.mxu0 0.0
    %455 = vmatprep.subr.mxu0 0.0
    %456 = vmatpush1.msra.mxu0 0.0
    %457 = vmatprep.subr.mxu0 0.0
    %458 = vmatpush1.msra.mxu0 0.0
    %459 = vmatprep.subr.mxu0 0.0
    %460 = vmatpush1.msra.mxu0 0.0
    %461 = vmatprep.subr.mxu0 0.0
    %462 = vmatpush1.msra.mxu0 0.0
    %463 = vmatprep.subr.mxu0 0.0
    %464 = vmatpush1.msra.mxu0 0.0
    %465 = vmatprep.subr.mxu0 0.0
    %466 = vmatpush1.msra.mxu0 0.0
    %467 = vmatprep.subr.mxu0 0.0
    %468 = vmatpush1.msra.mxu0 0.0
    %469 = vmatprep.subr.mxu0 0.0
    %470 = vmatpush1.msra.mxu0 0.0
    %471 = vmatprep.subr.mxu0 0.0
    %472 = vmatpush1.msra.mxu0 0.0
    %473 = vmatprep.subr.mxu0 0.0
    %474 = vmatpush1.msra.mxu0 0.0
    %475 = vmatprep.subr.mxu0 0.0
    %476 = vmatpush1.msra.mxu0 0.0
    %477 = vmatprep.subr.mxu0 0.0
    %478 = vmatpush1.msra.mxu0 0.0
    %479 = vmatprep.subr.mxu0 0.0
    %480 = vmatpush1.msra.mxu0 0.0
    %481 = vmatprep.subr.mxu0 0.0
    %482 = vmatpush1.msra.mxu0 0.0
    %483 = vmatprep.subr.mxu0 0.0
    %484 = vmatpush1.msra.mxu0 0.0
    %485 = vmatprep.mubr.f32.mxu0 0.0
    %486 = vmatmul.mubr.f32.gmra.mrb[0].mxu0 %v419
    %v487 = vpop.f32.mrb[0].mxu0
    %v488 = vadd.f32 0.0, %v487
    %v489 = vpop.f32.mrb[0].mxu0
    %v490 = vadd.f32 0.0, %v489
    %491 = vdwg.mxu0
    %v492 = vmul.f32 %v488, 0.015625
    %v493 = vmul.f32 %v490, 0.015625
    %v494 = vadd.f32 %v492, 1e-05
    %v495 = vadd.f32 %v493, 1e-05
    %v496 = vrsqrt.pop %v494
    %v497 = vrsqrt.pop %v495
    %v498 = vmul.f32 %v344, %v496
    %v499 = vmul.f32 %v345, %v497
    %v500 = vlaneseq
    %v501 = vshrl.u32 %v500, 7
    %v502 = vsub.s32 1, %v501
    %v503 = vrot.slane %v66, %v502
    %v504 = vlaneseq
    %v505 = vshrl.u32 %v504, 7
    %v506 = vsub.s32 5, %v505
    %v507 = vrot.slane %v66, %v506
    %v510 = vlaneseq
    %v511 = vshrl.u32 %v510, 7
    %v512 = vsub.s32 1, %v511
    %v513 = vrot.slane %v503, %v512
    %v514 = vlaneseq
    %v515 = vshrl.u32 %v514, 7
    %v516 = vsub.s32 1, %v515
    %v517 = vrot.slane %v507, %v516
    %v518 = vmul.f32 %v498, %v513
    %v519 = vmul.f32 %v499, %v517
    %v520 = vlaneseq
    %v521 = vshrl.u32 %v520, 7
    %v522 = vsub.s32 2, %v521
    %v523 = vrot.slane %v66, %v522
    %v524 = vlaneseq
    %v525 = vshrl.u32 %v524, 7
    %v526 = vsub.s32 6, %v525
    %v527 = vrot.slane %v66, %v526
    %v530 = vlaneseq
    %v531 = vshrl.u32 %v530, 7
    %v532 = vsub.s32 2, %v531
    %v533 = vrot.slane %v523, %v532
    %v534 = vlaneseq
    %v535 = vshrl.u32 %v534, 7
    %v536 = vsub.s32 2, %v535
    %v537 = vrot.slane %v527, %v536
    %v538 = vadd.f32 %v518, %v533
    %v539 = vadd.f32 %v519, %v537
    %v542 = vcombine.low %v538, %v539
    %544 = vst [vmem:[#allocation5] sm:$0xff] %v542
    // Predicated region
    $region26: #{tpu_custom_call.1} parent=1 // pred_check
      _
    $region27: #{tpu_custom_call.1} parent=1 // pred_check_branch
      %546 = sbr.rel (0) target = $region29
    $region28: #{tpu_custom_call.1} parent=1 // pred_region
      %s548 = ssub.s32 128, 128
      %549 = vsyncadd [#allocation4], %s548
      %s551 = sshll.u32 [#allocation5], 4
      %s552 = int_to_ptr.vmem [resolvable:$true] %s551
      %554 = dma.vmem_to_hbm [thread:$0]  %s552, 128, %s5, [#allocation4]
    $region29: #{tpu_custom_call.1} parent=1 // pred_fallthru
      _
    // Predicated region
    $region30: #{tpu_custom_call.1} parent=1 // pred_check
      _
    $region31: #{tpu_custom_call.1} parent=1 // pred_check_branch
      %556 = sbr.rel (0) target = $region33
    $region32: #{tpu_custom_call.1} parent=1 // pred_region
      %557 = dma.done [#allocation4], 128
    $region33: #{tpu_custom_call.1} parent=1 // pred_fallthru
      _
    %558 = vsyncpa [#allocation3], 1
    %559 = vsyncpa [#allocation4], 1

</llo_original>
